<compile_context>
chip_gen: v5e
topology: v5e:2x2
jax: 0.10.0
libtpu: 0.0.40
codegen_flags: <defaults>
</compile_context>

<pallas_src>
import functools
import math

import jax
import jax.numpy as jnp
import numpy as np
from jax import lax
from jax.experimental import pallas as pl
from jax.experimental.pallas import tpu as pltpu  # noqa: F401  (kept for TPU-specific extensions)

# ----------------------------- configuration --------------------------------
HIDDEN = 32                 # transformer.d_model
NUM_GROUPS = 32             # GroupNorm(32, hidden_dim) -> 1 channel per group
NUM_QUERIES = 8             # extra.NUM_QUERIES
NUM_JOINTS = 15             # cfg.MODEL.NUM_JOINTS  -> class dim = 16
NUM_CLASSES_P1 = NUM_JOINTS + 1
NUM_DEC_LAYERS = 3          # transformer.decoder.num_layers
NUM_FEATURE_LEVELS = 2      # == len(backbone.num_channels)
BACKBONE_CHANNELS = [4, 8]
GN_EPS = 1e-5
INV_SIG_EPS = 1e-5
AUX_LOSS = True
LANE = 128                  # lane-dense padding target


# ===================== Pallas kernel 1: 1x1 conv + GroupNorm =================
# Single program for all batches of one level. Weights are padded to 128
# output channels (pad channels are exactly zero after GN scale/shift and get
# sliced away in the wrapper), so the output store is a full-lane vst.
def _conv1x1_gn_kernel(x_ref, w_ref, b_ref, gw_ref, gb_ref, o_ref, *, B, HW):
    # x_ref: (B*HW, Cin), w_ref: (Cin, 128), biases/scales: (1, 128)
    y = jnp.dot(x_ref[...], w_ref[...],
                preferred_element_type=jnp.float32) + b_ref[...]      # (B*HW, 128)
    y3 = y.reshape(B, HW, LANE)                                       # split rows only
    inv_hw = 1.0 / float(HW)
    mean = jnp.sum(y3, axis=1, keepdims=True) * inv_hw                # (B, 1, 128)
    var = jnp.sum(y3 * y3, axis=1, keepdims=True) * inv_hw - mean * mean
    var = jnp.maximum(var, 0.0)                                       # cancellation guard
    yn = (y3 - mean) * lax.rsqrt(var + GN_EPS)
    o_ref[...] = yn * gw_ref[...] + gb_ref[...]                       # (B, HW, 128)


def input_proj_level(x_flat, w, b, gw, gb, B, HW):
    """x_flat: (B*HW, Cin) -> (B, HW, HIDDEN); 1x1 conv + GroupNorm(32, HIDDEN)."""
    Cin, D = w.shape
    w_p = jnp.zeros((Cin, LANE), jnp.float32).at[:, :D].set(w)
    b_p = jnp.zeros((1, LANE), jnp.float32).at[:, :D].set(b)
    gw_p = jnp.zeros((1, LANE), jnp.float32).at[:, :D].set(gw)
    gb_p = jnp.zeros((1, LANE), jnp.float32).at[:, :D].set(gb)

    out = pl.pallas_call(
        functools.partial(_conv1x1_gn_kernel, B=B, HW=HW),
        out_shape=jax.ShapeDtypeStruct((B, HW, LANE), jnp.float32),
    )(x_flat, w_p, b_p, gw_p, gb_p)
    return out[..., :D]


# ============ Pallas kernel 2: class / keypoint heads, all layers ============
# Single program over the whole (L*B*Q, H) = (48, 32) slab.
#   wa (32,128): cols [0:H)   = kpt-MLP layer-1 weight w1
#                cols [H:H+C) = class_embed weight wc       (fused first matmul)
#   w2 (128,32): rows [0:H) = w2, rest zero  (so relu'd logit cols contribute 0)
#   w3 (32,128): cols [H+C:H+C+2) = kpt-MLP layer-3 weight
#   r  (48,128): reference padded with 0.5 (inverse_sigmoid(0.5)=0) outside coords
# Output (48,128): cols [H:H+C) = logits, cols [H+C:H+C+2) = coords (lane-dense).
def _heads_kernel(h_ref, r_ref, wa_ref, ba_ref, w2_ref, b2_ref, w3_ref, b3_ref,
                  o_ref, *, c_lo, c_hi):
    h = h_ref[...]                                                    # (N, H)
    z = jnp.dot(h, wa_ref[...],
                preferred_element_type=jnp.float32) + ba_ref[...]     # (N, 128)

    t = jnp.maximum(z, 0.0)                                           # relu (layer 1)
    t = jnp.maximum(jnp.dot(t, w2_ref[...],
                            preferred_element_type=jnp.float32) + b2_ref[...], 0.0)  # (N, H)
    t = jnp.dot(t, w3_ref[...],
                preferred_element_type=jnp.float32) + b3_ref[...]     # (N, 128)

    # tmp += inverse_sigmoid(reference);  coord = sigmoid(tmp)
    r = jnp.clip(r_ref[...], 0.0, 1.0)
    x1 = jnp.maximum(r, INV_SIG_EPS)
    x2 = jnp.maximum(1.0 - r, INV_SIG_EPS)
    s = jax.nn.sigmoid(t + jnp.log(x1 / x2))                          # (N, 128)

    col = lax.broadcasted_iota(jnp.int32, z.shape, 1)
    is_logit = (col >= c_lo) & (col < c_hi)
    o_ref[...] = jnp.where(is_logit, z, s)


def prediction_heads(hs, refs_all, hp):
    """hs: (L,B,Q,H), refs_all: (L,B,Q,2) -> logits (L,B,Q,C+1), coords (L,B,Q,2)."""
    L, B, Q, H = hs.shape
    C1 = hp["wc"].shape[1]
    N = L * B * Q
    c_lo, c_hi = H, H + C1
    co = H + C1                                    # coord columns: [co, co+2)

    wa = (jnp.zeros((H, LANE), jnp.float32)
          .at[:, :H].set(hp["w1"]).at[:, c_lo:c_hi].set(hp["wc"]))
    ba = (jnp.zeros((1, LANE), jnp.float32)
          .at[:, :H].set(hp["b1"]).at[:, c_lo:c_hi].set(hp["bc"]))
    w2p = jnp.zeros((LANE, H), jnp.float32).at[:H, :].set(hp["w2"])
    b2 = hp["b2"]                                                     # (1, H)
    w3p = jnp.zeros((H, LANE), jnp.float32).at[:, co:co + 2].set(hp["w3"])
    b3p = jnp.zeros((1, LANE), jnp.float32).at[:, co:co + 2].set(hp["b3"])

    h2 = hs.reshape(N, H)
    r2 = refs_all.reshape(N, 2)
    rp = jnp.full((N, LANE), 0.5, jnp.float32).at[:, co:co + 2].set(r2)

    packed = pl.pallas_call(
        functools.partial(_heads_kernel, c_lo=c_lo, c_hi=c_hi),
        out_shape=jax.ShapeDtypeStruct((N, LANE), jnp.float32),
    )(h2, rp, wa, ba, w2p, b2, w3p, b3p)

    packed = packed.reshape(L, B, Q, LANE)
    logits = packed[..., c_lo:c_hi]
    coords = packed[..., co:co + 2]
    return logits, coords


# ===================== plain-JAX stubs for injected submodules ===============
def stub_backbone(x, params):
    """x: (B, 3, H, W) NCHW.  Returns NCHW feature maps at 2 scales."""
    B, C, H, W = x.shape
    feats = []
    for lvl, (stride, c_out) in enumerate(zip((2, 4), BACKBONE_CHANNELS)):
        p = x.reshape(B, C, H // stride, stride, W // stride, stride).mean(axis=(3, 5))
        f = jnp.einsum("bchw,cd->bdhw", p, params["backbone_proj"][lvl])
        feats.append(jnp.tanh(f))
    return feats


def stub_transformer(srcs_flat, query_embed, params):
    """Deterministic stand-in for the deformable transformer.

    srcs_flat: list of (B, HW, D).  Returns hs (L,B,Q,D), init_reference
    (B,Q,2), inter_references (L,B,Q,2), matching the real return convention.
    """
    B = srcs_flat[0].shape[0]
    pooled = jnp.concatenate(srcs_flat, axis=1).mean(axis=1)       # (B, D)
    q_pos, tgt = jnp.split(query_embed, 2, axis=1)                 # (Q,D), (Q,D)
    init_ref = jax.nn.sigmoid(q_pos @ params["w_ref"])             # (Q, 2)
    init_ref = jnp.broadcast_to(init_ref[None], (B, NUM_QUERIES, 2))
    h = tgt[None] + pooled[:, None, :]
    hs, inter_refs = [], []
    for l in range(NUM_DEC_LAYERS):
        h = jnp.tanh(h @ params["w_dec"][l] + pooled[:, None, :])
        hs.append(h)
        inter_refs.append(jax.nn.sigmoid(h @ params["w_ref"]))
    return jnp.stack(hs), init_ref, jnp.stack(inter_refs)


# ============================ full forward pass ==============================
def deformable_pose_transformer_forward(x, params):
    features = stub_backbone(x, params)

    srcs = []
    for l, feat in enumerate(features):
        B, C, H, W = feat.shape
        xf = jnp.transpose(feat, (0, 2, 3, 1)).reshape(B * H * W, C)   # NCHW -> (B*HW, C)
        pp = params["input_proj"][l]
        srcs.append(input_proj_level(xf, pp["w"], pp["b"], pp["gw"], pp["gb"],
                                     B, H * W))

    hs, init_ref, inter_refs = stub_transformer(srcs, params["query_embed"], params)

    # reference for lvl 0 is init_reference, else inter_references[lvl-1]
    refs_all = jnp.concatenate([init_ref[None], inter_refs[:-1]], axis=0)   # (L,B,Q,2)

    logits, coords = prediction_heads(hs, refs_all, params["heads"])

    out = {"pred_logits": logits[-1], "pred_coords": coords[-1]}
    if AUX_LOSS:
        out["aux_outputs"] = [
            {"pred_logits": logits[i], "pred_coords": coords[i]}
            for i in range(logits.shape[0] - 1)
        ]
    return out, (hs, refs_all, srcs)


# ============================ pure-JAX references ============================
def ref_conv_gn(x, w, b, gw, gb):
    B, HW, Cin = x.shape
    D = w.shape[1]
    cg = D // NUM_GROUPS
    y = x @ w + b
    yg = y.reshape(B, HW, NUM_GROUPS, cg)
    mean = yg.mean(axis=(1, 3), keepdims=True)
    var = ((yg - mean) ** 2).mean(axis=(1, 3), keepdims=True)
    yn = ((yg - mean) / jnp.sqrt(var + GN_EPS)).reshape(B, HW, D)
    return yn * gw + gb


def ref_heads(hs, refs_all, hp):
    logits = hs @ hp["wc"] + hp["bc"]
    t = jnp.maximum(hs @ hp["w1"] + hp["b1"], 0.0)
    t = jnp.maximum(t @ hp["w2"] + hp["b2"], 0.0)
    t = t @ hp["w3"] + hp["b3"]
    r = jnp.clip(refs_all, 0.0, 1.0)
    inv = jnp.log(jnp.maximum(r, INV_SIG_EPS) / jnp.maximum(1.0 - r, INV_SIG_EPS))
    return logits, jax.nn.sigmoid(t + inv)


# ============================= parameter init ================================
def init_params(key):
    ks = jax.random.split(key, 16)
    bias_value = -math.log((1.0 - 0.01) / 0.01)

    input_proj = []
    for l, cin in enumerate(BACKBONE_CHANNELS):
        kw, kgw, kgb = jax.random.split(ks[l], 3)
        input_proj.append({
            "w": jax.random.normal(kw, (cin, HIDDEN), jnp.float32)
                 * math.sqrt(2.0 / (cin + HIDDEN)),          # ~xavier
            "b": jnp.zeros((1, HIDDEN), jnp.float32),         # constant_(bias, 0)
            "gw": jnp.ones((1, HIDDEN), jnp.float32)
                  + 0.1 * jax.random.normal(kgw, (1, HIDDEN), jnp.float32),
            "gb": 0.1 * jax.random.normal(kgb, (1, HIDDEN), jnp.float32),
        })

    heads = {
        "wc": 0.1 * jax.random.normal(ks[4], (HIDDEN, NUM_CLASSES_P1), jnp.float32),
        "bc": jnp.full((1, NUM_CLASSES_P1), bias_value, jnp.float32),
        "w1": 0.1 * jax.random.normal(ks[5], (HIDDEN, HIDDEN), jnp.float32),
        "b1": 0.1 * jax.random.normal(ks[6], (1, HIDDEN), jnp.float32),
        "w2": 0.1 * jax.random.normal(ks[7], (HIDDEN, HIDDEN), jnp.float32),
        "b2": 0.1 * jax.random.normal(ks[8], (1, HIDDEN), jnp.float32),
        "w3": jnp.zeros((HIDDEN, 2), jnp.float32),            # constant_(weight, 0)
        "b3": jnp.zeros((1, 2), jnp.float32),                  # constant_(bias, 0)
    }

    params = {
        "input_proj": input_proj,
        "heads": heads,
        "query_embed": 0.5 * jax.random.normal(
            ks[9], (NUM_QUERIES, 2 * HIDDEN), jnp.float32),
        "w_ref": 0.5 * jax.random.normal(ks[10], (HIDDEN, 2), jnp.float32),
        "w_dec": 0.2 * jax.random.normal(
            ks[11], (NUM_DEC_LAYERS, HIDDEN, HIDDEN), jnp.float32),
        "backbone_proj": [
            jax.random.normal(ks[12 + l], (3, c), jnp.float32)
            for l, c in enumerate(BACKBONE_CHANNELS)
        ],
    }
    return params


# ================================== main =====================================
if __name__ == "__main__":
    key = jax.random.PRNGKey(0)
    kx, kp = jax.random.split(key)
    x = jax.random.normal(kx, (2, 3, 16, 16), jnp.float32)   # NCHW like PyTorch
    params = init_params(kp)

    fwd = jax.jit(deformable_pose_transformer_forward)       # whole forward fused
    out, (hs, refs_all, srcs) = fwd(x, params)
    jax.block_until_ready(out["pred_logits"])
    jax.block_until_ready(out["pred_coords"])

    # ---- correctness check against pure-JAX reference ----
    features = stub_backbone(x, params)
    ok = True
    for l, feat in enumerate(features):
        B, C, H, W = feat.shape
        xf = jnp.transpose(feat, (0, 2, 3, 1)).reshape(B, H * W, C)
        pp = params["input_proj"][l]
        ref = ref_conv_gn(xf, pp["w"], pp["b"], pp["gw"], pp["gb"])
        ok &= bool(np.allclose(np.asarray(srcs[l]), np.asarray(ref),
                               rtol=1e-4, atol=1e-4))
    ref_logits, ref_coords = ref_heads(hs, refs_all, params["heads"])
    ok &= bool(np.allclose(np.asarray(out["pred_logits"]),
                           np.asarray(ref_logits[-1]), rtol=1e-4, atol=1e-4))
    ok &= bool(np.allclose(np.asarray(out["pred_coords"]),
                           np.asarray(ref_coords[-1]), rtol=1e-4, atol=1e-4))

    assert ok, "Pallas kernels disagree with pure-JAX reference"
    print("KERNEL_OK")
</pallas_src>

<mosaic_0001>
module attributes {stable_mosaic.version = 11 : i64} {
  func.func @_conv1x1_gn_kernel(%arg0: memref<128x4xf32, #tpu.memory_space<vmem>>, %arg1: memref<4x128xf32, #tpu.memory_space<vmem>>, %arg2: memref<1x128xf32, #tpu.memory_space<vmem>>, %arg3: memref<1x128xf32, #tpu.memory_space<vmem>>, %arg4: memref<1x128xf32, #tpu.memory_space<vmem>>, %arg5: memref<2x64x128xf32, #tpu.memory_space<vmem>>) attributes {dimension_semantics = [], scalar_prefetch = 0 : i64, scratch_operands = 0 : i64, tpu.core_type = #tpu.core_type<tc>} {
    %c0 = arith.constant 0 : index
    %c0_0 = arith.constant 0 : index
    %0 = vector.load %arg0[%c0, %c0_0] : memref<128x4xf32, #tpu.memory_space<vmem>>, vector<128x4xf32>
    %c0_1 = arith.constant 0 : index
    %c0_2 = arith.constant 0 : index
    %1 = vector.load %arg1[%c0_1, %c0_2] : memref<4x128xf32, #tpu.memory_space<vmem>>, vector<4x128xf32>
    %cst = arith.constant dense<0.000000e+00> : vector<128x128xf32>
    %2 = tpu.matmul %0, %1, %cst {dimension_numbers = #tpu.dot_dimension_numbers<[1], [0], [0], [1], [0, 0, 1, 1], [], []>} : vector<128x4xf32>, vector<4x128xf32>, vector<128x128xf32> -> vector<128x128xf32>
    %c0_3 = arith.constant 0 : index
    %c0_4 = arith.constant 0 : index
    %3 = vector.load %arg2[%c0_3, %c0_4] : memref<1x128xf32, #tpu.memory_space<vmem>>, vector<1x128xf32>
    %4 = vector.broadcast %3 : vector<1x128xf32> to vector<128x128xf32>
    %5 = arith.addf %2, %4 : vector<128x128xf32>
    %6 = vector.shape_cast %5 : vector<128x128xf32> to vector<2x64x128xf32>
    %cst_5 = arith.constant dense<0.000000e+00> : vector<2x128xf32>
    %7 = vector.multi_reduction <add>, %6, %cst_5 [1] : vector<2x64x128xf32> to vector<2x128xf32>
    %8 = vector.shape_cast %7 : vector<2x128xf32> to vector<2x1x128xf32>
    %cst_6 = arith.constant 1.562500e-02 : f32
    %9 = vector.broadcast %cst_6 : f32 to vector<2x1x128xf32>
    %10 = arith.mulf %8, %9 : vector<2x1x128xf32>
    %11 = arith.mulf %6, %6 : vector<2x64x128xf32>
    %cst_7 = arith.constant dense<0.000000e+00> : vector<2x128xf32>
    %12 = vector.multi_reduction <add>, %11, %cst_7 [1] : vector<2x64x128xf32> to vector<2x128xf32>
    %13 = vector.shape_cast %12 : vector<2x128xf32> to vector<2x1x128xf32>
    %cst_8 = arith.constant 1.562500e-02 : f32
    %14 = vector.broadcast %cst_8 : f32 to vector<2x1x128xf32>
    %15 = arith.mulf %13, %14 : vector<2x1x128xf32>
    %16 = arith.mulf %10, %10 : vector<2x1x128xf32>
    %17 = arith.subf %15, %16 : vector<2x1x128xf32>
    %cst_9 = arith.constant 0.000000e+00 : f32
    %18 = vector.broadcast %cst_9 : f32 to vector<2x1x128xf32>
    %19 = arith.maximumf %17, %18 : vector<2x1x128xf32>
    %20 = vector.broadcast %10 : vector<2x1x128xf32> to vector<2x64x128xf32>
    %21 = arith.subf %6, %20 : vector<2x64x128xf32>
    %cst_10 = arith.constant 9.99999974E-6 : f32
    %22 = vector.broadcast %cst_10 : f32 to vector<2x1x128xf32>
    %23 = arith.addf %19, %22 : vector<2x1x128xf32>
    %24 = math.rsqrt %23 : vector<2x1x128xf32>
    %25 = vector.broadcast %24 : vector<2x1x128xf32> to vector<2x64x128xf32>
    %26 = arith.mulf %21, %25 : vector<2x64x128xf32>
    %c0_11 = arith.constant 0 : index
    %c0_12 = arith.constant 0 : index
    %27 = vector.load %arg3[%c0_11, %c0_12] : memref<1x128xf32, #tpu.memory_space<vmem>>, vector<1x128xf32>
    %28 = vector.shape_cast %27 : vector<1x128xf32> to vector<1x1x128xf32>
    %29 = vector.broadcast %28 : vector<1x1x128xf32> to vector<2x64x128xf32>
    %30 = arith.mulf %26, %29 : vector<2x64x128xf32>
    %c0_13 = arith.constant 0 : index
    %c0_14 = arith.constant 0 : index
    %31 = vector.load %arg4[%c0_13, %c0_14] : memref<1x128xf32, #tpu.memory_space<vmem>>, vector<1x128xf32>
    %32 = vector.shape_cast %31 : vector<1x128xf32> to vector<1x1x128xf32>
    %33 = vector.broadcast %32 : vector<1x1x128xf32> to vector<2x64x128xf32>
    %34 = arith.addf %30, %33 : vector<2x64x128xf32>
    %c0_15 = arith.constant 0 : index
    %c0_16 = arith.constant 0 : index
    %c0_17 = arith.constant 0 : index
    %35 = vector.load %arg5[%c0_15, %c0_16, %c0_17] : memref<2x64x128xf32, #tpu.memory_space<vmem>>, vector<2x64x128xf32>
    tpu.vector_store %arg5[%c0_15, %c0_16, %c0_17], %34 {strides = array<i32>} : memref<2x64x128xf32, #tpu.memory_space<vmem>>, vector<2x64x128xf32>,
    return
  }
}

module attributes {stable_mosaic.version = 11 : i64} {
  func.func @_conv1x1_gn_kernel(%arg0: memref<32x8xf32, #tpu.memory_space<vmem>>, %arg1: memref<8x128xf32, #tpu.memory_space<vmem>>, %arg2: memref<1x128xf32, #tpu.memory_space<vmem>>, %arg3: memref<1x128xf32, #tpu.memory_space<vmem>>, %arg4: memref<1x128xf32, #tpu.memory_space<vmem>>, %arg5: memref<2x16x128xf32, #tpu.memory_space<vmem>>) attributes {dimension_semantics = [], scalar_prefetch = 0 : i64, scratch_operands = 0 : i64, tpu.core_type = #tpu.core_type<tc>} {
    %c0 = arith.constant 0 : index
    %c0_0 = arith.constant 0 : index
    %0 = vector.load %arg0[%c0, %c0_0] : memref<32x8xf32, #tpu.memory_space<vmem>>, vector<32x8xf32>
    %c0_1 = arith.constant 0 : index
    %c0_2 = arith.constant 0 : index
    %1 = vector.load %arg1[%c0_1, %c0_2] : memref<8x128xf32, #tpu.memory_space<vmem>>, vector<8x128xf32>
    %cst = arith.constant dense<0.000000e+00> : vector<32x128xf32>
    %2 = tpu.matmul %0, %1, %cst {dimension_numbers = #tpu.dot_dimension_numbers<[1], [0], [0], [1], [0, 0, 1, 1], [], []>} : vector<32x8xf32>, vector<8x128xf32>, vector<32x128xf32> -> vector<32x128xf32>
    %c0_3 = arith.constant 0 : index
    %c0_4 = arith.constant 0 : index
    %3 = vector.load %arg2[%c0_3, %c0_4] : memref<1x128xf32, #tpu.memory_space<vmem>>, vector<1x128xf32>
    %4 = vector.broadcast %3 : vector<1x128xf32> to vector<32x128xf32>
    %5 = arith.addf %2, %4 : vector<32x128xf32>
    %6 = vector.shape_cast %5 : vector<32x128xf32> to vector<2x16x128xf32>
    %cst_5 = arith.constant dense<0.000000e+00> : vector<2x128xf32>
    %7 = vector.multi_reduction <add>, %6, %cst_5 [1] : vector<2x16x128xf32> to vector<2x128xf32>
    %8 = vector.shape_cast %7 : vector<2x128xf32> to vector<2x1x128xf32>
    %cst_6 = arith.constant 6.250000e-02 : f32
    %9 = vector.broadcast %cst_6 : f32 to vector<2x1x128xf32>
    %10 = arith.mulf %8, %9 : vector<2x1x128xf32>
    %11 = arith.mulf %6, %6 : vector<2x16x128xf32>
    %cst_7 = arith.constant dense<0.000000e+00> : vector<2x128xf32>
    %12 = vector.multi_reduction <add>, %11, %cst_7 [1] : vector<2x16x128xf32> to vector<2x128xf32>
    %13 = vector.shape_cast %12 : vector<2x128xf32> to vector<2x1x128xf32>
    %cst_8 = arith.constant 6.250000e-02 : f32
    %14 = vector.broadcast %cst_8 : f32 to vector<2x1x128xf32>
    %15 = arith.mulf %13, %14 : vector<2x1x128xf32>
    %16 = arith.mulf %10, %10 : vector<2x1x128xf32>
    %17 = arith.subf %15, %16 : vector<2x1x128xf32>
    %cst_9 = arith.constant 0.000000e+00 : f32
    %18 = vector.broadcast %cst_9 : f32 to vector<2x1x128xf32>
    %19 = arith.maximumf %17, %18 : vector<2x1x128xf32>
    %20 = vector.broadcast %10 : vector<2x1x128xf32> to vector<2x16x128xf32>
    %21 = arith.subf %6, %20 : vector<2x16x128xf32>
    %cst_10 = arith.constant 9.99999974E-6 : f32
    %22 = vector.broadcast %cst_10 : f32 to vector<2x1x128xf32>
    %23 = arith.addf %19, %22 : vector<2x1x128xf32>
    %24 = math.rsqrt %23 : vector<2x1x128xf32>
    %25 = vector.broadcast %24 : vector<2x1x128xf32> to vector<2x16x128xf32>
    %26 = arith.mulf %21, %25 : vector<2x16x128xf32>
    %c0_11 = arith.constant 0 : index
    %c0_12 = arith.constant 0 : index
    %27 = vector.load %arg3[%c0_11, %c0_12] : memref<1x128xf32, #tpu.memory_space<vmem>>, vector<1x128xf32>
    %28 = vector.shape_cast %27 : vector<1x128xf32> to vector<1x1x128xf32>
    %29 = vector.broadcast %28 : vector<1x1x128xf32> to vector<2x16x128xf32>
    %30 = arith.mulf %26, %29 : vector<2x16x128xf32>
    %c0_13 = arith.constant 0 : index
    %c0_14 = arith.constant 0 : index
    %31 = vector.load %arg4[%c0_13, %c0_14] : memref<1x128xf32, #tpu.memory_space<vmem>>, vector<1x128xf32>
    %32 = vector.shape_cast %31 : vector<1x128xf32> to vector<1x1x128xf32>
    %33 = vector.broadcast %32 : vector<1x1x128xf32> to vector<2x16x128xf32>
    %34 = arith.addf %30, %33 : vector<2x16x128xf32>
    %c0_15 = arith.constant 0 : index
    %c0_16 = arith.constant 0 : index
    %c0_17 = arith.constant 0 : index
    %35 = vector.load %arg5[%c0_15, %c0_16, %c0_17] : memref<2x16x128xf32, #tpu.memory_space<vmem>>, vector<2x16x128xf32>
    tpu.vector_store %arg5[%c0_15, %c0_16, %c0_17], %34 {strides = array<i32>} : memref<2x16x128xf32, #tpu.memory_space<vmem>>, vector<2x16x128xf32>,
    return
  }
}

module attributes {stable_mosaic.version = 11 : i64} {
  func.func @_heads_kernel(%arg0: memref<48x32xf32, #tpu.memory_space<vmem>>, %arg1: memref<48x128xf32, #tpu.memory_space<vmem>>, %arg2: memref<32x128xf32, #tpu.memory_space<vmem>>, %arg3: memref<1x128xf32, #tpu.memory_space<vmem>>, %arg4: memref<128x32xf32, #tpu.memory_space<vmem>>, %arg5: memref<1x32xf32, #tpu.memory_space<vmem>>, %arg6: memref<32x128xf32, #tpu.memory_space<vmem>>, %arg7: memref<1x128xf32, #tpu.memory_space<vmem>>, %arg8: memref<48x128xf32, #tpu.memory_space<vmem>>) attributes {dimension_semantics = [], scalar_prefetch = 0 : i64, scratch_operands = 0 : i64, tpu.core_type = #tpu.core_type<tc>} {
    %c0 = arith.constant 0 : index
    %c0_0 = arith.constant 0 : index
    %0 = vector.load %arg0[%c0, %c0_0] : memref<48x32xf32, #tpu.memory_space<vmem>>, vector<48x32xf32>
    %c0_1 = arith.constant 0 : index
    %c0_2 = arith.constant 0 : index
    %1 = vector.load %arg2[%c0_1, %c0_2] : memref<32x128xf32, #tpu.memory_space<vmem>>, vector<32x128xf32>
    %cst = arith.constant dense<0.000000e+00> : vector<48x128xf32>
    %2 = tpu.matmul %0, %1, %cst {dimension_numbers = #tpu.dot_dimension_numbers<[1], [0], [0], [1], [0, 0, 1, 1], [], []>} : vector<48x32xf32>, vector<32x128xf32>, vector<48x128xf32> -> vector<48x128xf32>
    %c0_3 = arith.constant 0 : index
    %c0_4 = arith.constant 0 : index
    %3 = vector.load %arg3[%c0_3, %c0_4] : memref<1x128xf32, #tpu.memory_space<vmem>>, vector<1x128xf32>
    %4 = vector.broadcast %3 : vector<1x128xf32> to vector<48x128xf32>
    %5 = arith.addf %2, %4 : vector<48x128xf32>
    %cst_5 = arith.constant 0.000000e+00 : f32
    %6 = vector.broadcast %cst_5 : f32 to vector<48x128xf32>
    %7 = arith.maximumf %5, %6 : vector<48x128xf32>
    %c0_6 = arith.constant 0 : index
    %c0_7 = arith.constant 0 : index
    %8 = vector.load %arg4[%c0_6, %c0_7] : memref<128x32xf32, #tpu.memory_space<vmem>>, vector<128x32xf32>
    %cst_8 = arith.constant dense<0.000000e+00> : vector<48x32xf32>
    %9 = tpu.matmul %7, %8, %cst_8 {dimension_numbers = #tpu.dot_dimension_numbers<[1], [0], [0], [1], [0, 0, 1, 1], [], []>} : vector<48x128xf32>, vector<128x32xf32>, vector<48x32xf32> -> vector<48x32xf32>
    %c0_9 = arith.constant 0 : index
    %c0_10 = arith.constant 0 : index
    %10 = vector.load %arg5[%c0_9, %c0_10] : memref<1x32xf32, #tpu.memory_space<vmem>>, vector<1x32xf32>
    %11 = vector.broadcast %10 : vector<1x32xf32> to vector<48x32xf32>
    %12 = arith.addf %9, %11 : vector<48x32xf32>
    %cst_11 = arith.constant 0.000000e+00 : f32
    %13 = vector.broadcast %cst_11 : f32 to vector<48x32xf32>
    %14 = arith.maximumf %12, %13 : vector<48x32xf32>
    %c0_12 = arith.constant 0 : index
    %c0_13 = arith.constant 0 : index
    %15 = vector.load %arg6[%c0_12, %c0_13] : memref<32x128xf32, #tpu.memory_space<vmem>>, vector<32x128xf32>
    %cst_14 = arith.constant dense<0.000000e+00> : vector<48x128xf32>
    %16 = tpu.matmul %14, %15, %cst_14 {dimension_numbers = #tpu.dot_dimension_numbers<[1], [0], [0], [1], [0, 0, 1, 1], [], []>} : vector<48x32xf32>, vector<32x128xf32>, vector<48x128xf32> -> vector<48x128xf32>
    %c0_15 = arith.constant 0 : index
    %c0_16 = arith.constant 0 : index
    %17 = vector.load %arg7[%c0_15, %c0_16] : memref<1x128xf32, #tpu.memory_space<vmem>>, vector<1x128xf32>
    %18 = vector.broadcast %17 : vector<1x128xf32> to vector<48x128xf32>
    %19 = arith.addf %16, %18 : vector<48x128xf32>
    %c0_17 = arith.constant 0 : index
    %c0_18 = arith.constant 0 : index
    %20 = vector.load %arg1[%c0_17, %c0_18] : memref<48x128xf32, #tpu.memory_space<vmem>>, vector<48x128xf32>
    %cst_19 = arith.constant 0.000000e+00 : f32
    %cst_20 = arith.constant 1.000000e+00 : f32
    %21 = vector.broadcast %cst_19 : f32 to vector<48x128xf32>
    %22 = arith.maximumf %21, %20 : vector<48x128xf32>
    %23 = vector.broadcast %cst_20 : f32 to vector<48x128xf32>
    %24 = arith.minimumf %23, %22 : vector<48x128xf32>
    %cst_21 = arith.constant 9.99999974E-6 : f32
    %25 = vector.broadcast %cst_21 : f32 to vector<48x128xf32>
    %26 = arith.maximumf %24, %25 : vector<48x128xf32>
    %cst_22 = arith.constant 1.000000e+00 : f32
    %27 = vector.broadcast %cst_22 : f32 to vector<48x128xf32>
    %28 = arith.subf %27, %24 : vector<48x128xf32>
    %cst_23 = arith.constant 9.99999974E-6 : f32
    %29 = vector.broadcast %cst_23 : f32 to vector<48x128xf32>
    %30 = arith.maximumf %28, %29 : vector<48x128xf32>
    %31 = arith.divf %26, %30 : vector<48x128xf32>
    %32 = math.log %31 : vector<48x128xf32>
    %33 = arith.addf %19, %32 : vector<48x128xf32>
    %34 = arith.negf %33 : vector<48x128xf32>
    %35 = math.exp %34 : vector<48x128xf32>
    %cst_24 = arith.constant 1.000000e+00 : f32
    %36 = vector.broadcast %cst_24 : f32 to vector<48x128xf32>
    %37 = arith.addf %36, %35 : vector<48x128xf32>
    %38 = arith.divf %36, %37 : vector<48x128xf32>
    %39 = tpu.iota {dimensions = array<i32: 1>} : vector<48x128xi32>
    %c32_i32 = arith.constant 32 : i32
    %40 = vector.broadcast %c32_i32 : i32 to vector<48x128xi32>
    %41 = arith.cmpi sge, %39, %40 : vector<48x128xi32>
    %c48_i32 = arith.constant 48 : i32
    %42 = vector.broadcast %c48_i32 : i32 to vector<48x128xi32>
    %43 = arith.cmpi slt, %39, %42 : vector<48x128xi32>
    %44 = arith.andi %41, %43 : vector<48x128xi1>
    %45 = arith.select %44, %5, %38 : vector<48x128xi1>, vector<48x128xf32>
    %c0_25 = arith.constant 0 : index
    %c0_26 = arith.constant 0 : index
    %46 = vector.load %arg8[%c0_25, %c0_26] : memref<48x128xf32, #tpu.memory_space<vmem>>, vector<48x128xf32>
    tpu.vector_store %arg8[%c0_25, %c0_26], %45 {strides = array<i32>} : memref<48x128xf32, #tpu.memory_space<vmem>>, vector<48x128xf32>,
    return
  }
}

</mosaic_0001>

<llo_original>
// kernel: split.3
$region0: #{split.3}
  #allocation0 [shape = 'u32[2048]{0}', space=vmem, size = 0x2000, scoped, tag = 'scoped memory for split.3']
  #allocation1 [shape = 'u32[2048]{0}', space=vmem, size = 0x2000, scoped, tag = 'scoped memory for split.3']
  #allocation2 [shape = 'u32[2048]{0}', space=vmem, size = 0x2000, scoped, tag = 'scoped memory for split.3']
  #allocation3 [shape = 'u32[2048]{0}', space=vmem, size = 0x2000, scoped, tag = 'scoped memory for split.3']
  #allocation4 [shape = 'u32[2048]{0}', space=vmem, size = 0x2000, scoped, tag = 'scoped memory for split.3']
  #allocation5 [shape = 's32[1]{0}', space=sflag, size = 0x4, scoped, tag = 'scoped memory for split.3']
  %s0 = inlined_call_operand.vmem [shape: f32[8,64], index: 0, kind: input, shape index: {}]
  %s1 = inlined_call_operand.vmem [shape: f32[8,32], index: 1, kind: output, shape index: {}]
  %v2 = vld [vmem:[%s0] sm:$0xff]
  %v3 = vlaneseq
  %v4 = vand.u32 %v3, 127
  %vm5 = vcmp.lt.s32.totalorder %v4, 32
  %v6 = vsel %vm5, 0, %v2
  %7 = vrot.lane.b32.xlu0 %v6, 96
  %v8 = vpop.permute.xlu0 %7
  %9 = vst [vmem:[%s1] sm:$0xff] %v8

// kernel: deformable_pose_transformer_forward.3
$region0: #{deformable_pose_transformer_forward.3}
  #allocation0 [shape = 'u32[]', space=smem, size = 0x4, offset = 0x4, fixed_abs, tag = 'smem constant byte address 0x4 - core index']
  #allocation1 [shape = 'u32[72,128]{1,0:T(1,128)}', space=vmem, size = 0x9000, scoped, tag = 'internal scratch']
  %s0 = inlined_call_operand.vmem [shape: f32[128,4], index: 0, kind: input, shape index: {}]
  %s1 = inlined_call_operand.vmem [shape: f32[4,128], index: 1, kind: input, shape index: {}]
  %s2 = inlined_call_operand.vmem [shape: f32[1,128], index: 2, kind: input, shape index: {}]
  %s3 = inlined_call_operand.vmem [shape: f32[1,128], index: 3, kind: input, shape index: {}]
  %s4 = inlined_call_operand.vmem [shape: f32[1,128], index: 4, kind: input, shape index: {}]
  %s5 = inlined_call_operand.vmem [shape: f32[2,64,128], index: 5, kind: output, shape index: {}]
  %s6 = sld [smem:[#allocation0]]
  $region30: #{deformable_pose_transformer_forward.3} parent=0
    _
  %s8 = ssub.s32 1, %s6
  %s9 = scalar_select 0, %s8, %s6
  // Predicated region
  $region2: #{deformable_pose_transformer_forward.3} parent=0 // pred_check
    _
  $region3: #{deformable_pose_transformer_forward.3} parent=0 // pred_check_branch
    %11 = sbr.rel (0) target = $region5
  $region4: #{deformable_pose_transformer_forward.3} parent=0 // pred_region
    _
  $region5: #{deformable_pose_transformer_forward.3} parent=0 // pred_fallthru
    _
  // Predicated region
  $region6: #{deformable_pose_transformer_forward.3} parent=0 // pred_check
    _
  $region7: #{deformable_pose_transformer_forward.3} parent=0 // pred_check_branch
    %13 = sbr.rel (0) target = $region9
  $region8: #{deformable_pose_transformer_forward.3} parent=0 // pred_region
    _
  $region9: #{deformable_pose_transformer_forward.3} parent=0 // pred_fallthru
    _
  // Predicated region
  $region10: #{deformable_pose_transformer_forward.3} parent=0 // pred_check
    _
  $region11: #{deformable_pose_transformer_forward.3} parent=0 // pred_check_branch
    %15 = sbr.rel (0) target = $region13
  $region12: #{deformable_pose_transformer_forward.3} parent=0 // pred_region
    _
  $region13: #{deformable_pose_transformer_forward.3} parent=0 // pred_fallthru
    _
  // Predicated region
  $region14: #{deformable_pose_transformer_forward.3} parent=0 // pred_check
    _
  $region15: #{deformable_pose_transformer_forward.3} parent=0 // pred_check_branch
    %17 = sbr.rel (0) target = $region17
  $region16: #{deformable_pose_transformer_forward.3} parent=0 // pred_region
    _
  $region17: #{deformable_pose_transformer_forward.3} parent=0 // pred_fallthru
    _
  // Predicated region
  $region18: #{deformable_pose_transformer_forward.3} parent=0 // pred_check
    _
  $region19: #{deformable_pose_transformer_forward.3} parent=0 // pred_check_branch
    %19 = sbr.rel (0) target = $region21
  $region20: #{deformable_pose_transformer_forward.3} parent=0 // pred_region
    _
  $region21: #{deformable_pose_transformer_forward.3} parent=0 // pred_fallthru
    _
  %v20 = vld [vmem:[%s0] sm:$0xff]
  %v21 = vld [vmem:[%s0 + $0x8] sm:$0xff]
  %v22 = vld [vmem:[%s0 + $0x10] sm:$0xff]
  %v23 = vld [vmem:[%s0 + $0x18] sm:$0xff]
  %v24 = vld [vmem:[%s0 + $0x20] sm:$0xff]
  %v25 = vld [vmem:[%s0 + $0x28] sm:$0xff]
  %v26 = vld [vmem:[%s0 + $0x30] sm:$0xff]
  %v27 = vld [vmem:[%s0 + $0x38] sm:$0xff]
  %v28 = vld [vmem:[%s0 + $0x40] sm:$0xff]
  %v29 = vld [vmem:[%s0 + $0x48] sm:$0xff]
  %v30 = vld [vmem:[%s0 + $0x50] sm:$0xff]
  %v31 = vld [vmem:[%s0 + $0x58] sm:$0xff]
  %v32 = vld [vmem:[%s0 + $0x60] sm:$0xff]
  %v33 = vld [vmem:[%s0 + $0x68] sm:$0xff]
  %v34 = vld [vmem:[%s0 + $0x70] sm:$0xff]
  %v35 = vld [vmem:[%s0 + $0x78] sm:$0xff]
  %v36 = vld [vmem:[%s1] sm:$0xf]
  %v37 = vld [vmem:[%s2] sm:$0x1]
  %v39 = vperm.slane %v37, 0
  %vm41 = vcmask 31744
  %v43 = vsel %vm41, %v20, 0
  %v46 = vsel %vm41, %v21, 0
  %v49 = vsel %vm41, %v22, 0
  %v52 = vsel %vm41, %v23, 0
  %v55 = vsel %vm41, %v24, 0
  %v58 = vsel %vm41, %v25, 0
  %v61 = vsel %vm41, %v26, 0
  %v64 = vsel %vm41, %v27, 0
  %v67 = vsel %vm41, %v28, 0
  %v70 = vsel %vm41, %v29, 0
  %v73 = vsel %vm41, %v30, 0
  %v76 = vsel %vm41, %v31, 0
  %v79 = vsel %vm41, %v32, 0
  %v82 = vsel %vm41, %v33, 0
  %v85 = vsel %vm41, %v34, 0
  %v88 = vsel %vm41, %v35, 0
  %vm90 = vcmask 1043456
  %v92 = vsel %vm90, %v36, 0
  %94 = vmatpush.msra.mxu0 0.0
  %95 = vmatpush.msra.mxu0 0.0
  %96 = vmatpush.msra.mxu0 0.0
  %97 = vmatpush.msra.mxu0 0.0
  %98 = vmatpush.msra.mxu0 0.0
  %99 = vmatpush.msra.mxu0 0.0
  %100 = vmatpush.msra.mxu0 0.0
  %101 = vmatpush.msra.mxu0 0.0
  %102 = vmatpush.msra.mxu0 0.0
  %103 = vmatpush.msra.mxu0 0.0
  %104 = vmatpush.msra.mxu0 0.0
  %105 = vmatpush.msra.mxu0 0.0
  %106 = vmatpush.msra.mxu0 0.0
  %107 = vmatpush.msra.mxu0 0.0
  %108 = vmatpush.msra.mxu0 0.0
  %109 = vmatpush.msra.mxu0 %v92
  %110 = vmatmul.f32.gmra.mxu0 %v43
  %v111 = vpop.f32.mrf.mxu0
  %v112 = vadd.f32 %v39, %v111
  %113 = vmatmul.f32.gmra.mxu0 %v46
  %v114 = vpop.f32.mrf.mxu0
  %v115 = vadd.f32 %v39, %v114
  %116 = vmatmul.f32.gmra.mxu0 %v49
  %v117 = vpop.f32.mrf.mxu0
  %v118 = vadd.f32 %v39, %v117
  %119 = vmatmul.f32.gmra.mxu0 %v52
  %v120 = vpop.f32.mrf.mxu0
  %v121 = vadd.f32 %v39, %v120
  %122 = vmatmul.f32.gmra.mxu0 %v55
  %v123 = vpop.f32.mrf.mxu0
  %v124 = vadd.f32 %v39, %v123
  %125 = vmatmul.f32.gmra.mxu0 %v58
  %v126 = vpop.f32.mrf.mxu0
  %v127 = vadd.f32 %v39, %v126
  %128 = vmatmul.f32.gmra.mxu0 %v61
  %v129 = vpop.f32.mrf.mxu0
  %v130 = vadd.f32 %v39, %v129
  %131 = vmatmul.f32.gmra.mxu0 %v64
  %v132 = vpop.f32.mrf.mxu0
  %v133 = vadd.f32 %v39, %v132
  %134 = vmatmul.f32.gmra.mxu0 %v67
  %v135 = vpop.f32.mrf.mxu0
  %v136 = vadd.f32 %v39, %v135
  %137 = vmatmul.f32.gmra.mxu0 %v70
  %v138 = vpop.f32.mrf.mxu0
  %v139 = vadd.f32 %v39, %v138
  %140 = vmatmul.f32.gmra.mxu0 %v73
  %v141 = vpop.f32.mrf.mxu0
  %v142 = vadd.f32 %v39, %v141
  %143 = vmatmul.f32.gmra.mxu0 %v76
  %v144 = vpop.f32.mrf.mxu0
  %v145 = vadd.f32 %v39, %v144
  %146 = vmatmul.f32.gmra.mxu0 %v79
  %v147 = vpop.f32.mrf.mxu0
  %v148 = vadd.f32 %v39, %v147
  %149 = vmatmul.f32.gmra.mxu0 %v82
  %v150 = vpop.f32.mrf.mxu0
  %v151 = vadd.f32 %v39, %v150
  %152 = vmatmul.f32.gmra.mxu0 %v85
  %v153 = vpop.f32.mrf.mxu0
  %v154 = vadd.f32 %v39, %v153
  %155 = vmatmul.f32.gmra.mxu0 %v88
  %v156 = vpop.f32.mrf.mxu0
  %v157 = vadd.f32 %v39, %v156
  %158 = vdwg.mxu0
  %v159 = vadd.f32 %v112, %v115
  %v160 = vadd.f32 %v159, %v118
  %v161 = vadd.f32 %v160, %v121
  %v162 = vadd.f32 %v161, %v124
  %v163 = vadd.f32 %v162, %v127
  %v164 = vadd.f32 %v163, %v130
  %v165 = vadd.f32 %v164, %v133
  %v166 = vrot.slane %v165, 4
  %v167 = vadd.f32 %v165, %v166
  %v168 = vrot.slane %v167, 2
  %v169 = vadd.f32 %v167, %v168
  %v170 = vrot.slane %v169, 1
  %v171 = vadd.f32 %v169, %v170
  %v172 = vadd.f32 %v136, %v139
  %v173 = vadd.f32 %v172, %v142
  %v174 = vadd.f32 %v173, %v145
  %v175 = vadd.f32 %v174, %v148
  %v176 = vadd.f32 %v175, %v151
  %v177 = vadd.f32 %v176, %v154
  %v178 = vadd.f32 %v177, %v157
  %v179 = vrot.slane %v178, 4
  %v180 = vadd.f32 %v178, %v179
  %v181 = vrot.slane %v180, 2
  %v182 = vadd.f32 %v180, %v181
  %v183 = vrot.slane %v182, 1
  %v184 = vadd.f32 %v182, %v183
  %v185 = vmul.f32 %v171, 0.015625
  %v186 = vmul.f32 %v184, 0.015625
  %v187 = vmul.f32 %v112, %v112
  %v188 = vmul.f32 %v115, %v115
  %v189 = vmul.f32 %v118, %v118
  %v190 = vmul.f32 %v121, %v121
  %v191 = vmul.f32 %v124, %v124
  %v192 = vmul.f32 %v127, %v127
  %v193 = vmul.f32 %v130, %v130
  %v194 = vmul.f32 %v133, %v133
  %v195 = vmul.f32 %v136, %v136
  %v196 = vmul.f32 %v139, %v139
  %v197 = vmul.f32 %v142, %v142
  %v198 = vmul.f32 %v145, %v145
  %v199 = vmul.f32 %v148, %v148
  %v200 = vmul.f32 %v151, %v151
  %v201 = vmul.f32 %v154, %v154
  %v202 = vmul.f32 %v157, %v157
  %v203 = vadd.f32 %v187, %v188
  %v204 = vadd.f32 %v203, %v189
  %v205 = vadd.f32 %v204, %v190
  %v206 = vadd.f32 %v205, %v191
  %v207 = vadd.f32 %v206, %v192
  %v208 = vadd.f32 %v207, %v193
  %v209 = vadd.f32 %v208, %v194
  %v210 = vrot.slane %v209, 4
  %v211 = vadd.f32 %v209, %v210
  %v212 = vrot.slane %v211, 2
  %v213 = vadd.f32 %v211, %v212
  %v214 = vrot.slane %v213, 1
  %v215 = vadd.f32 %v213, %v214
  %v216 = vadd.f32 %v195, %v196
  %v217 = vadd.f32 %v216, %v197
  %v218 = vadd.f32 %v217, %v198
  %v219 = vadd.f32 %v218, %v199
  %v220 = vadd.f32 %v219, %v200
  %v221 = vadd.f32 %v220, %v201
  %v222 = vadd.f32 %v221, %v202
  %v223 = vrot.slane %v222, 4
  %v224 = vadd.f32 %v222, %v223
  %v225 = vrot.slane %v224, 2
  %v226 = vadd.f32 %v224, %v225
  %v227 = vrot.slane %v226, 1
  %v228 = vadd.f32 %v226, %v227
  %v229 = vmul.f32 %v215, 0.015625
  %v230 = vmul.f32 %v228, 0.015625
  %v231 = vmul.f32 %v185, %v185
  %v232 = vmul.f32 %v186, %v186
  %v233 = vsub.f32 %v229, %v231
  %v234 = vsub.f32 %v230, %v232
  %v235 = vmax.f32 %v233, 0.0
  %v236 = vmax.f32 %v234, 0.0
  %v237 = vsub.f32 %v112, %v185
  %v238 = vsub.f32 %v115, %v185
  %v239 = vsub.f32 %v118, %v185
  %v240 = vsub.f32 %v121, %v185
  %v241 = vsub.f32 %v124, %v185
  %v242 = vsub.f32 %v127, %v185
  %v243 = vsub.f32 %v130, %v185
  %v244 = vsub.f32 %v133, %v185
  %v245 = vsub.f32 %v136, %v186
  %v246 = vsub.f32 %v139, %v186
  %v247 = vsub.f32 %v142, %v186
  %v248 = vsub.f32 %v145, %v186
  %v249 = vsub.f32 %v148, %v186
  %v250 = vsub.f32 %v151, %v186
  %v251 = vsub.f32 %v154, %v186
  %v252 = vsub.f32 %v157, %v186
  %v253 = vadd.f32 %v235, 1e-05
  %v254 = vadd.f32 %v236, 1e-05
  %v255 = vrsqrt.pop %v253
  %v256 = vmul.f32 %v255, %v253
  %v257 = vmul.f32 %v256, %v255
  %v258 = vmul.f32 0.5, %v257
  %v259 = vsub.f32 1.5, %v258
  %v260 = vmul.f32 %v255, %v259
  %vm261 = vweird.f32 %v253
  %vm262 = vweird.f32 %v255
  %vm263 = vmor %vm261, %vm262
  %v264 = vsel %vm263, %v255, %v260
  %v265 = vrsqrt.pop %v254
  %v266 = vmul.f32 %v265, %v254
  %v267 = vmul.f32 %v266, %v265
  %v268 = vmul.f32 0.5, %v267
  %v269 = vsub.f32 1.5, %v268
  %v270 = vmul.f32 %v265, %v269
  %vm271 = vweird.f32 %v254
  %vm272 = vweird.f32 %v265
  %vm273 = vmor %vm271, %vm272
  %v274 = vsel %vm273, %v265, %v270
  %v275 = vmul.f32 %v237, %v264
  %v276 = vmul.f32 %v238, %v264
  %v277 = vmul.f32 %v239, %v264
  %v278 = vmul.f32 %v240, %v264
  %v279 = vmul.f32 %v241, %v264
  %v280 = vmul.f32 %v242, %v264
  %v281 = vmul.f32 %v243, %v264
  %v282 = vmul.f32 %v244, %v264
  %v283 = vmul.f32 %v245, %v274
  %v284 = vmul.f32 %v246, %v274
  %v285 = vmul.f32 %v247, %v274
  %v286 = vmul.f32 %v248, %v274
  %v287 = vmul.f32 %v249, %v274
  %v288 = vmul.f32 %v250, %v274
  %v289 = vmul.f32 %v251, %v274
  %v290 = vmul.f32 %v252, %v274
  %v291 = vld [vmem:[%s3] sm:$0x1]
  %v293 = vperm.slane %v291, 0
  %v295 = vmul.f32 %v275, %v293
  %v296 = vmul.f32 %v276, %v293
  %v297 = vmul.f32 %v277, %v293
  %v298 = vmul.f32 %v278, %v293
  %v299 = vmul.f32 %v279, %v293
  %v300 = vmul.f32 %v280, %v293
  %v301 = vmul.f32 %v281, %v293
  %v302 = vmul.f32 %v282, %v293
  %v303 = vmul.f32 %v283, %v293
  %v304 = vmul.f32 %v284, %v293
  %v305 = vmul.f32 %v285, %v293
  %v306 = vmul.f32 %v286, %v293
  %v307 = vmul.f32 %v287, %v293
  %v308 = vmul.f32 %v288, %v293
  %v309 = vmul.f32 %v289, %v293
  %v310 = vmul.f32 %v290, %v293
  %v311 = vld [vmem:[%s4] sm:$0x1]
  %v313 = vperm.slane %v311, 0
  %v315 = vadd.f32 %v295, %v313
  %v316 = vadd.f32 %v296, %v313
  %v317 = vadd.f32 %v297, %v313
  %v318 = vadd.f32 %v298, %v313
  %v319 = vadd.f32 %v299, %v313
  %v320 = vadd.f32 %v300, %v313
  %v321 = vadd.f32 %v301, %v313
  %v322 = vadd.f32 %v302, %v313
  %v323 = vadd.f32 %v303, %v313
  %v324 = vadd.f32 %v304, %v313
  %v325 = vadd.f32 %v305, %v313
  %v326 = vadd.f32 %v306, %v313
  %v327 = vadd.f32 %v307, %v313
  %v328 = vadd.f32 %v308, %v313
  %v329 = vadd.f32 %v309, %v313
  %v330 = vadd.f32 %v310, %v313
  %331 = vst [vmem:[%s5] sm:$0xff] %v315
  %332 = vst [vmem:[%s5 + $0x8] sm:$0xff] %v316
  %333 = vst [vmem:[%s5 + $0x10] sm:$0xff] %v317
  %334 = vst [vmem:[%s5 + $0x18] sm:$0xff] %v318
  %335 = vst [vmem:[%s5 + $0x20] sm:$0xff] %v319
  %336 = vst [vmem:[%s5 + $0x28] sm:$0xff] %v320
  %337 = vst [vmem:[%s5 + $0x30] sm:$0xff] %v321
  %338 = vst [vmem:[%s5 + $0x38] sm:$0xff] %v322
  %339 = vst [vmem:[%s5 + $0x40] sm:$0xff] %v323
  %340 = vst [vmem:[%s5 + $0x48] sm:$0xff] %v324
  %341 = vst [vmem:[%s5 + $0x50] sm:$0xff] %v325
  %342 = vst [vmem:[%s5 + $0x58] sm:$0xff] %v326
  %343 = vst [vmem:[%s5 + $0x60] sm:$0xff] %v327
  %344 = vst [vmem:[%s5 + $0x68] sm:$0xff] %v328
  %345 = vst [vmem:[%s5 + $0x70] sm:$0xff] %v329
  %346 = vst [vmem:[%s5 + $0x78] sm:$0xff] %v330
  // Predicated region
  $region22: #{deformable_pose_transformer_forward.3} parent=0 // pred_check
    _
  $region23: #{deformable_pose_transformer_forward.3} parent=0 // pred_check_branch
    %348 = sbr.rel (0) target = $region25
  $region24: #{deformable_pose_transformer_forward.3} parent=0 // pred_region
    _
  $region25: #{deformable_pose_transformer_forward.3} parent=0 // pred_fallthru
    _
  // Predicated region
  $region26: #{deformable_pose_transformer_forward.3} parent=0 // pred_check
    _
  $region27: #{deformable_pose_transformer_forward.3} parent=0 // pred_check_branch
    %350 = sbr.rel (0) target = $region29
  $region28: #{deformable_pose_transformer_forward.3} parent=0 // pred_region
    _
  $region29: #{deformable_pose_transformer_forward.3} parent=0 // pred_fallthru
    _

// kernel: deformable_pose_transformer_forward.4
$region0: #{deformable_pose_transformer_forward.4}
  #allocation0 [shape = 'u32[]', space=smem, size = 0x4, offset = 0x4, fixed_abs, tag = 'smem constant byte address 0x4 - core index']
  #allocation1 [shape = 'u32[72,128]{1,0:T(1,128)}', space=vmem, size = 0x9000, scoped, tag = 'internal scratch']
  %s0 = inlined_call_operand.vmem [shape: f32[32,8], index: 0, kind: input, shape index: {}]
  %s1 = inlined_call_operand.vmem [shape: f32[8,128], index: 1, kind: input, shape index: {}]
  %s2 = inlined_call_operand.vmem [shape: f32[1,128], index: 2, kind: input, shape index: {}]
  %s3 = inlined_call_operand.vmem [shape: f32[1,128], index: 3, kind: input, shape index: {}]
  %s4 = inlined_call_operand.vmem [shape: f32[1,128], index: 4, kind: input, shape index: {}]
  %s5 = inlined_call_operand.vmem [shape: f32[2,16,128], index: 5, kind: output, shape index: {}]
  %s6 = sld [smem:[#allocation0]]
  $region30: #{deformable_pose_transformer_forward.4} parent=0
    _
  %s8 = ssub.s32 1, %s6
  %s9 = scalar_select 0, %s8, %s6
  // Predicated region
  $region2: #{deformable_pose_transformer_forward.4} parent=0 // pred_check
    _
  $region3: #{deformable_pose_transformer_forward.4} parent=0 // pred_check_branch
    %11 = sbr.rel (0) target = $region5
  $region4: #{deformable_pose_transformer_forward.4} parent=0 // pred_region
    _
  $region5: #{deformable_pose_transformer_forward.4} parent=0 // pred_fallthru
    _
  // Predicated region
  $region6: #{deformable_pose_transformer_forward.4} parent=0 // pred_check
    _
  $region7: #{deformable_pose_transformer_forward.4} parent=0 // pred_check_branch
    %13 = sbr.rel (0) target = $region9
  $region8: #{deformable_pose_transformer_forward.4} parent=0 // pred_region
    _
  $region9: #{deformable_pose_transformer_forward.4} parent=0 // pred_fallthru
    _
  // Predicated region
  $region10: #{deformable_pose_transformer_forward.4} parent=0 // pred_check
    _
  $region11: #{deformable_pose_transformer_forward.4} parent=0 // pred_check_branch
    %15 = sbr.rel (0) target = $region13
  $region12: #{deformable_pose_transformer_forward.4} parent=0 // pred_region
    _
  $region13: #{deformable_pose_transformer_forward.4} parent=0 // pred_fallthru
    _
  // Predicated region
  $region14: #{deformable_pose_transformer_forward.4} parent=0 // pred_check
    _
  $region15: #{deformable_pose_transformer_forward.4} parent=0 // pred_check_branch
    %17 = sbr.rel (0) target = $region17
  $region16: #{deformable_pose_transformer_forward.4} parent=0 // pred_region
    _
  $region17: #{deformable_pose_transformer_forward.4} parent=0 // pred_fallthru
    _
  // Predicated region
  $region18: #{deformable_pose_transformer_forward.4} parent=0 // pred_check
    _
  $region19: #{deformable_pose_transformer_forward.4} parent=0 // pred_check_branch
    %19 = sbr.rel (0) target = $region21
  $region20: #{deformable_pose_transformer_forward.4} parent=0 // pred_region
    _
  $region21: #{deformable_pose_transformer_forward.4} parent=0 // pred_fallthru
    _
  %v20 = vld [vmem:[%s0] sm:$0xff]
  %v21 = vld [vmem:[%s0 + $0x8] sm:$0xff]
  %v22 = vld [vmem:[%s0 + $0x10] sm:$0xff]
  %v23 = vld [vmem:[%s0 + $0x18] sm:$0xff]
  %v24 = vld [vmem:[%s1] sm:$0xff]
  %v25 = vld [vmem:[%s2] sm:$0x1]
  %v27 = vperm.slane %v25, 0
  %vm29 = vcmask 64512
  %v31 = vsel %vm29, %v20, 0
  %v34 = vsel %vm29, %v21, 0
  %v37 = vsel %vm29, %v22, 0
  %v40 = vsel %vm29, %v23, 0
  %42 = vmatpush.msra.mxu0 0.0
  %43 = vmatpush.msra.mxu0 0.0
  %44 = vmatpush.msra.mxu0 0.0
  %45 = vmatpush.msra.mxu0 0.0
  %46 = vmatpush.msra.mxu0 0.0
  %47 = vmatpush.msra.mxu0 0.0
  %48 = vmatpush.msra.mxu0 0.0
  %49 = vmatpush.msra.mxu0 0.0
  %50 = vmatpush.msra.mxu0 0.0
  %51 = vmatpush.msra.mxu0 0.0
  %52 = vmatpush.msra.mxu0 0.0
  %53 = vmatpush.msra.mxu0 0.0
  %54 = vmatpush.msra.mxu0 0.0
  %55 = vmatpush.msra.mxu0 0.0
  %56 = vmatpush.msra.mxu0 0.0
  %57 = vmatpush.msra.mxu0 %v24
  %58 = vmatmul.f32.gmra.mxu0 %v31
  %v59 = vpop.f32.mrf.mxu0
  %v60 = vadd.f32 %v27, %v59
  %61 = vmatmul.f32.gmra.mxu0 %v34
  %v62 = vpop.f32.mrf.mxu0
  %v63 = vadd.f32 %v27, %v62
  %64 = vmatmul.f32.gmra.mxu0 %v37
  %v65 = vpop.f32.mrf.mxu0
  %v66 = vadd.f32 %v27, %v65
  %67 = vmatmul.f32.gmra.mxu0 %v40
  %v68 = vpop.f32.mrf.mxu0
  %v69 = vadd.f32 %v27, %v68
  %70 = vdwg.mxu0
  %v71 = vadd.f32 %v60, %v63
  %v72 = vrot.slane %v71, 4
  %v73 = vadd.f32 %v71, %v72
  %v74 = vrot.slane %v73, 2
  %v75 = vadd.f32 %v73, %v74
  %v76 = vrot.slane %v75, 1
  %v77 = vadd.f32 %v75, %v76
  %v78 = vadd.f32 %v66, %v69
  %v79 = vrot.slane %v78, 4
  %v80 = vadd.f32 %v78, %v79
  %v81 = vrot.slane %v80, 2
  %v82 = vadd.f32 %v80, %v81
  %v83 = vrot.slane %v82, 1
  %v84 = vadd.f32 %v82, %v83
  %v85 = vmul.f32 %v77, 0.0625
  %v86 = vmul.f32 %v84, 0.0625
  %v87 = vmul.f32 %v60, %v60
  %v88 = vmul.f32 %v63, %v63
  %v89 = vmul.f32 %v66, %v66
  %v90 = vmul.f32 %v69, %v69
  %v91 = vadd.f32 %v87, %v88
  %v92 = vrot.slane %v91, 4
  %v93 = vadd.f32 %v91, %v92
  %v94 = vrot.slane %v93, 2
  %v95 = vadd.f32 %v93, %v94
  %v96 = vrot.slane %v95, 1
  %v97 = vadd.f32 %v95, %v96
  %v98 = vadd.f32 %v89, %v90
  %v99 = vrot.slane %v98, 4
  %v100 = vadd.f32 %v98, %v99
  %v101 = vrot.slane %v100, 2
  %v102 = vadd.f32 %v100, %v101
  %v103 = vrot.slane %v102, 1
  %v104 = vadd.f32 %v102, %v103
  %v105 = vmul.f32 %v97, 0.0625
  %v106 = vmul.f32 %v104, 0.0625
  %v107 = vmul.f32 %v85, %v85
  %v108 = vmul.f32 %v86, %v86
  %v109 = vsub.f32 %v105, %v107
  %v110 = vsub.f32 %v106, %v108
  %v111 = vmax.f32 %v109, 0.0
  %v112 = vmax.f32 %v110, 0.0
  %v113 = vsub.f32 %v60, %v85
  %v114 = vsub.f32 %v63, %v85
  %v115 = vsub.f32 %v66, %v86
  %v116 = vsub.f32 %v69, %v86
  %v117 = vadd.f32 %v111, 1e-05
  %v118 = vadd.f32 %v112, 1e-05
  %v119 = vrsqrt.pop %v117
  %v120 = vmul.f32 %v119, %v117
  %v121 = vmul.f32 %v120, %v119
  %v122 = vmul.f32 0.5, %v121
  %v123 = vsub.f32 1.5, %v122
  %v124 = vmul.f32 %v119, %v123
  %vm125 = vweird.f32 %v117
  %vm126 = vweird.f32 %v119
  %vm127 = vmor %vm125, %vm126
  %v128 = vsel %vm127, %v119, %v124
  %v129 = vrsqrt.pop %v118
  %v130 = vmul.f32 %v129, %v118
  %v131 = vmul.f32 %v130, %v129
  %v132 = vmul.f32 0.5, %v131
  %v133 = vsub.f32 1.5, %v132
  %v134 = vmul.f32 %v129, %v133
  %vm135 = vweird.f32 %v118
  %vm136 = vweird.f32 %v129
  %vm137 = vmor %vm135, %vm136
  %v138 = vsel %vm137, %v129, %v134
  %v139 = vmul.f32 %v113, %v128
  %v140 = vmul.f32 %v114, %v128
  %v141 = vmul.f32 %v115, %v138
  %v142 = vmul.f32 %v116, %v138
  %v143 = vld [vmem:[%s3] sm:$0x1]
  %v145 = vperm.slane %v143, 0
  %v147 = vmul.f32 %v139, %v145
  %v148 = vmul.f32 %v140, %v145
  %v149 = vmul.f32 %v141, %v145
  %v150 = vmul.f32 %v142, %v145
  %v151 = vld [vmem:[%s4] sm:$0x1]
  %v153 = vperm.slane %v151, 0
  %v155 = vadd.f32 %v147, %v153
  %v156 = vadd.f32 %v148, %v153
  %v157 = vadd.f32 %v149, %v153
  %v158 = vadd.f32 %v150, %v153
  %159 = vst [vmem:[%s5] sm:$0xff] %v155
  %160 = vst [vmem:[%s5 + $0x8] sm:$0xff] %v156
  %161 = vst [vmem:[%s5 + $0x10] sm:$0xff] %v157
  %162 = vst [vmem:[%s5 + $0x18] sm:$0xff] %v158
  // Predicated region
  $region22: #{deformable_pose_transformer_forward.4} parent=0 // pred_check
    _
  $region23: #{deformable_pose_transformer_forward.4} parent=0 // pred_check_branch
    %164 = sbr.rel (0) target = $region25
  $region24: #{deformable_pose_transformer_forward.4} parent=0 // pred_region
    _
  $region25: #{deformable_pose_transformer_forward.4} parent=0 // pred_fallthru
    _
  // Predicated region
  $region26: #{deformable_pose_transformer_forward.4} parent=0 // pred_check
    _
  $region27: #{deformable_pose_transformer_forward.4} parent=0 // pred_check_branch
    %166 = sbr.rel (0) target = $region29
  $region28: #{deformable_pose_transformer_forward.4} parent=0 // pred_region
    _
  $region29: #{deformable_pose_transformer_forward.4} parent=0 // pred_fallthru
    _

// kernel: deformable_pose_transformer_forward.5
$region0: #{deformable_pose_transformer_forward.5}
  #allocation0 [shape = 'u32[]', space=smem, size = 0x4, offset = 0x4, fixed_abs, tag = 'smem constant byte address 0x4 - core index']
  #allocation1 [shape = 'u32[72,128]{1,0:T(1,128)}', space=vmem, size = 0x9000, scoped, tag = 'internal scratch']
  %s0 = inlined_call_operand.vmem [shape: f32[48,32], index: 0, kind: input, shape index: {}]
  %s1 = inlined_call_operand.vmem [shape: f32[48,128], index: 1, kind: input, shape index: {}]
  %s2 = inlined_call_operand.vmem [shape: f32[32,128], index: 2, kind: input, shape index: {}]
  %s3 = inlined_call_operand.vmem [shape: f32[1,128], index: 3, kind: input, shape index: {}]
  %s4 = inlined_call_operand.vmem [shape: f32[128,32], index: 4, kind: input, shape index: {}]
  %s5 = inlined_call_operand.vmem [shape: f32[1,32], index: 5, kind: input, shape index: {}]
  %s6 = inlined_call_operand.vmem [shape: f32[32,128], index: 6, kind: input, shape index: {}]
  %s7 = inlined_call_operand.vmem [shape: f32[1,128], index: 7, kind: input, shape index: {}]
  %s8 = inlined_call_operand.vmem [shape: f32[48,128], index: 8, kind: output, shape index: {}]
  %s9 = sld [smem:[#allocation0]]
  $region42: #{deformable_pose_transformer_forward.5} parent=0
    _
  %s11 = ssub.s32 1, %s9
  %s12 = scalar_select 0, %s11, %s9
  // Predicated region
  $region2: #{deformable_pose_transformer_forward.5} parent=0 // pred_check
    _
  $region3: #{deformable_pose_transformer_forward.5} parent=0 // pred_check_branch
    %14 = sbr.rel (0) target = $region5
  $region4: #{deformable_pose_transformer_forward.5} parent=0 // pred_region
    _
  $region5: #{deformable_pose_transformer_forward.5} parent=0 // pred_fallthru
    _
  // Predicated region
  $region6: #{deformable_pose_transformer_forward.5} parent=0 // pred_check
    _
  $region7: #{deformable_pose_transformer_forward.5} parent=0 // pred_check_branch
    %16 = sbr.rel (0) target = $region9
  $region8: #{deformable_pose_transformer_forward.5} parent=0 // pred_region
    _
  $region9: #{deformable_pose_transformer_forward.5} parent=0 // pred_fallthru
    _
  // Predicated region
  $region10: #{deformable_pose_transformer_forward.5} parent=0 // pred_check
    _
  $region11: #{deformable_pose_transformer_forward.5} parent=0 // pred_check_branch
    %18 = sbr.rel (0) target = $region13
  $region12: #{deformable_pose_transformer_forward.5} parent=0 // pred_region
    _
  $region13: #{deformable_pose_transformer_forward.5} parent=0 // pred_fallthru
    _
  // Predicated region
  $region14: #{deformable_pose_transformer_forward.5} parent=0 // pred_check
    _
  $region15: #{deformable_pose_transformer_forward.5} parent=0 // pred_check_branch
    %20 = sbr.rel (0) target = $region17
  $region16: #{deformable_pose_transformer_forward.5} parent=0 // pred_region
    _
  $region17: #{deformable_pose_transformer_forward.5} parent=0 // pred_fallthru
    _
  // Predicated region
  $region18: #{deformable_pose_transformer_forward.5} parent=0 // pred_check
    _
  $region19: #{deformable_pose_transformer_forward.5} parent=0 // pred_check_branch
    %22 = sbr.rel (0) target = $region21
  $region20: #{deformable_pose_transformer_forward.5} parent=0 // pred_region
    _
  $region21: #{deformable_pose_transformer_forward.5} parent=0 // pred_fallthru
    _
  // Predicated region
  $region22: #{deformable_pose_transformer_forward.5} parent=0 // pred_check
    _
  $region23: #{deformable_pose_transformer_forward.5} parent=0 // pred_check_branch
    %24 = sbr.rel (0) target = $region25
  $region24: #{deformable_pose_transformer_forward.5} parent=0 // pred_region
    _
  $region25: #{deformable_pose_transformer_forward.5} parent=0 // pred_fallthru
    _
  // Predicated region
  $region26: #{deformable_pose_transformer_forward.5} parent=0 // pred_check
    _
  $region27: #{deformable_pose_transformer_forward.5} parent=0 // pred_check_branch
    %26 = sbr.rel (0) target = $region29
  $region28: #{deformable_pose_transformer_forward.5} parent=0 // pred_region
    _
  $region29: #{deformable_pose_transformer_forward.5} parent=0 // pred_fallthru
    _
  // Predicated region
  $region30: #{deformable_pose_transformer_forward.5} parent=0 // pred_check
    _
  $region31: #{deformable_pose_transformer_forward.5} parent=0 // pred_check_branch
    %28 = sbr.rel (0) target = $region33
  $region32: #{deformable_pose_transformer_forward.5} parent=0 // pred_region
    _
  $region33: #{deformable_pose_transformer_forward.5} parent=0 // pred_fallthru
    _
  %v29 = vld [vmem:[%s0] sm:$0xff]
  %v30 = vld [vmem:[%s0 + $0x8] sm:$0xff]
  %v31 = vld [vmem:[%s0 + $0x10] sm:$0xff]
  %v32 = vld [vmem:[%s0 + $0x18] sm:$0xff]
  %v33 = vld [vmem:[%s0 + $0x20] sm:$0xff]
  %v34 = vld [vmem:[%s0 + $0x28] sm:$0xff]
  %v35 = vld [vmem:[%s2] sm:$0xff]
  %v36 = vld [vmem:[%s2 + $0x8] sm:$0xff]
  %v37 = vld [vmem:[%s2 + $0x10] sm:$0xff]
  %v38 = vld [vmem:[%s2 + $0x18] sm:$0xff]
  %v39 = vld [vmem:[%s3] sm:$0x1]
  %v41 = vperm.slane %v39, 0
  %vm43 = vcmask 261120
  %v45 = vsel %vm43, %v29, 0
  %v48 = vsel %vm43, %v30, 0
  %v51 = vsel %vm43, %v31, 0
  %v54 = vsel %vm43, %v32, 0
  %v57 = vsel %vm43, %v33, 0
  %v60 = vsel %vm43, %v34, 0
  %62 = vmatpush.msra.mxu0 0.0
  %63 = vmatpush.msra.mxu0 0.0
  %64 = vmatpush.msra.mxu0 0.0
  %65 = vmatpush.msra.mxu0 0.0
  %66 = vmatpush.msra.mxu0 0.0
  %67 = vmatpush.msra.mxu0 0.0
  %68 = vmatpush.msra.mxu0 0.0
  %69 = vmatpush.msra.mxu0 0.0
  %70 = vmatpush.msra.mxu0 0.0
  %71 = vmatpush.msra.mxu0 0.0
  %72 = vmatpush.msra.mxu0 0.0
  %73 = vmatpush.msra.mxu0 0.0
  %74 = vmatpush.msra.mxu0 %v38
  %75 = vmatpush.msra.mxu0 %v37
  %76 = vmatpush.msra.mxu0 %v36
  %77 = vmatpush.msra.mxu0 %v35
  %78 = vmatmul.f32.gmra.mxu0 %v45
  %v79 = vpop.f32.mrf.mxu0
  %v80 = vadd.f32 %v41, %v79
  %81 = vmatmul.f32.gmra.mxu0 %v48
  %v82 = vpop.f32.mrf.mxu0
  %v83 = vadd.f32 %v41, %v82
  %84 = vmatmul.f32.gmra.mxu0 %v51
  %v85 = vpop.f32.mrf.mxu0
  %v86 = vadd.f32 %v41, %v85
  %87 = vmatmul.f32.gmra.mxu0 %v54
  %v88 = vpop.f32.mrf.mxu0
  %v89 = vadd.f32 %v41, %v88
  %90 = vmatmul.f32.gmra.mxu0 %v57
  %v91 = vpop.f32.mrf.mxu0
  %v92 = vadd.f32 %v41, %v91
  %93 = vmatmul.f32.gmra.mxu0 %v60
  %v94 = vpop.f32.mrf.mxu0
  %v95 = vadd.f32 %v41, %v94
  %96 = vdwg.mxu0
  %v97 = vmax.f32 %v80, 0.0
  %v98 = vmax.f32 %v83, 0.0
  %v99 = vmax.f32 %v86, 0.0
  %v100 = vmax.f32 %v89, 0.0
  %v101 = vmax.f32 %v92, 0.0
  %v102 = vmax.f32 %v95, 0.0
  %v103 = vld [vmem:[%s4] sm:$0xff]
  %v104 = vld [vmem:[%s4 + $0x8] sm:$0xff]
  %v105 = vld [vmem:[%s4 + $0x10] sm:$0xff]
  %v106 = vld [vmem:[%s4 + $0x18] sm:$0xff]
  %v107 = vld [vmem:[%s4 + $0x20] sm:$0xff]
  %v108 = vld [vmem:[%s4 + $0x28] sm:$0xff]
  %v109 = vld [vmem:[%s4 + $0x30] sm:$0xff]
  %v110 = vld [vmem:[%s4 + $0x38] sm:$0xff]
  %v111 = vld [vmem:[%s4 + $0x40] sm:$0xff]
  %v112 = vld [vmem:[%s4 + $0x48] sm:$0xff]
  %v113 = vld [vmem:[%s4 + $0x50] sm:$0xff]
  %v114 = vld [vmem:[%s4 + $0x58] sm:$0xff]
  %v115 = vld [vmem:[%s4 + $0x60] sm:$0xff]
  %v116 = vld [vmem:[%s4 + $0x68] sm:$0xff]
  %v117 = vld [vmem:[%s4 + $0x70] sm:$0xff]
  %v118 = vld [vmem:[%s4 + $0x78] sm:$0xff]
  %v119 = vld [vmem:[%s5] sm:$0x1]
  %v121 = vperm.slane %v119, 0
  %123 = vmatpush.msra.mxu0 %v118
  %124 = vmatpush.msra.mxu0 %v117
  %125 = vmatpush.msra.mxu0 %v116
  %126 = vmatpush.msra.mxu0 %v115
  %127 = vmatpush.msra.mxu0 %v114
  %128 = vmatpush.msra.mxu0 %v113
  %129 = vmatpush.msra.mxu0 %v112
  %130 = vmatpush.msra.mxu0 %v111
  %131 = vmatpush.msra.mxu0 %v110
  %132 = vmatpush.msra.mxu0 %v109
  %133 = vmatpush.msra.mxu0 %v108
  %134 = vmatpush.msra.mxu0 %v107
  %135 = vmatpush.msra.mxu0 %v106
  %136 = vmatpush.msra.mxu0 %v105
  %137 = vmatpush.msra.mxu0 %v104
  %138 = vmatpush.msra.mxu0 %v103
  %139 = vmatmul.f32.gmra.mxu0 %v97
  %v140 = vpop.f32.mrf.mxu0
  %v141 = vadd.f32 %v121, %v140
  %142 = vmatmul.f32.gmra.mxu0 %v98
  %v143 = vpop.f32.mrf.mxu0
  %v144 = vadd.f32 %v121, %v143
  %145 = vmatmul.f32.gmra.mxu0 %v99
  %v146 = vpop.f32.mrf.mxu0
  %v147 = vadd.f32 %v121, %v146
  %148 = vmatmul.f32.gmra.mxu0 %v100
  %v149 = vpop.f32.mrf.mxu0
  %v150 = vadd.f32 %v121, %v149
  %151 = vmatmul.f32.gmra.mxu0 %v101
  %v152 = vpop.f32.mrf.mxu0
  %v153 = vadd.f32 %v121, %v152
  %154 = vmatmul.f32.gmra.mxu0 %v102
  %v155 = vpop.f32.mrf.mxu0
  %v156 = vadd.f32 %v121, %v155
  %157 = vdwg.mxu0
  %v158 = vmax.f32 %v141, 0.0
  %v159 = vmax.f32 %v144, 0.0
  %v160 = vmax.f32 %v147, 0.0
  %v161 = vmax.f32 %v150, 0.0
  %v162 = vmax.f32 %v153, 0.0
  %v163 = vmax.f32 %v156, 0.0
  %v164 = vld [vmem:[%s6] sm:$0xff]
  %v165 = vld [vmem:[%s6 + $0x8] sm:$0xff]
  %v166 = vld [vmem:[%s6 + $0x10] sm:$0xff]
  %v167 = vld [vmem:[%s6 + $0x18] sm:$0xff]
  %v168 = vld [vmem:[%s7] sm:$0x1]
  %v170 = vperm.slane %v168, 0
  %v173 = vsel %vm43, %v158, 0
  %v176 = vsel %vm43, %v159, 0
  %v179 = vsel %vm43, %v160, 0
  %v182 = vsel %vm43, %v161, 0
  %v185 = vsel %vm43, %v162, 0
  %v188 = vsel %vm43, %v163, 0
  %190 = vmatpush.msra.mxu0 0.0
  %191 = vmatpush.msra.mxu0 0.0
  %192 = vmatpush.msra.mxu0 0.0
  %193 = vmatpush.msra.mxu0 0.0
  %194 = vmatpush.msra.mxu0 0.0
  %195 = vmatpush.msra.mxu0 0.0
  %196 = vmatpush.msra.mxu0 0.0
  %197 = vmatpush.msra.mxu0 0.0
  %198 = vmatpush.msra.mxu0 0.0
  %199 = vmatpush.msra.mxu0 0.0
  %200 = vmatpush.msra.mxu0 0.0
  %201 = vmatpush.msra.mxu0 0.0
  %202 = vmatpush.msra.mxu0 %v167
  %203 = vmatpush.msra.mxu0 %v166
  %204 = vmatpush.msra.mxu0 %v165
  %205 = vmatpush.msra.mxu0 %v164
  %206 = vmatmul.f32.gmra.mxu0 %v173
  %v207 = vpop.f32.mrf.mxu0
  %v208 = vadd.f32 %v170, %v207
  %209 = vmatmul.f32.gmra.mxu0 %v176
  %v210 = vpop.f32.mrf.mxu0
  %v211 = vadd.f32 %v170, %v210
  %212 = vmatmul.f32.gmra.mxu0 %v179
  %v213 = vpop.f32.mrf.mxu0
  %v214 = vadd.f32 %v170, %v213
  %215 = vmatmul.f32.gmra.mxu0 %v182
  %v216 = vpop.f32.mrf.mxu0
  %v217 = vadd.f32 %v170, %v216
  %218 = vmatmul.f32.gmra.mxu0 %v185
  %v219 = vpop.f32.mrf.mxu0
  %v220 = vadd.f32 %v170, %v219
  %221 = vmatmul.f32.gmra.mxu0 %v188
  %v222 = vpop.f32.mrf.mxu0
  %v223 = vadd.f32 %v170, %v222
  %224 = vdwg.mxu0
  %v225 = vld [vmem:[%s1] sm:$0xff]
  %v226 = vld [vmem:[%s1 + $0x8] sm:$0xff]
  %v227 = vld [vmem:[%s1 + $0x10] sm:$0xff]
  %v228 = vld [vmem:[%s1 + $0x18] sm:$0xff]
  %v229 = vld [vmem:[%s1 + $0x20] sm:$0xff]
  %v230 = vld [vmem:[%s1 + $0x28] sm:$0xff]
  %v231 = vmax.f32 %v225, 0.0
  %v232 = vmax.f32 %v226, 0.0
  %v233 = vmax.f32 %v227, 0.0
  %v234 = vmax.f32 %v228, 0.0
  %v235 = vmax.f32 %v229, 0.0
  %v236 = vmax.f32 %v230, 0.0
  %v237 = vmin.f32 %v231, 1.0
  %v238 = vmin.f32 %v232, 1.0
  %v239 = vmin.f32 %v233, 1.0
  %v240 = vmin.f32 %v234, 1.0
  %v241 = vmin.f32 %v235, 1.0
  %v242 = vmin.f32 %v236, 1.0
  %v243 = vmax.f32 %v237, 1e-05
  %v244 = vmax.f32 %v238, 1e-05
  %v245 = vmax.f32 %v239, 1e-05
  %v246 = vmax.f32 %v240, 1e-05
  %v247 = vmax.f32 %v241, 1e-05
  %v248 = vmax.f32 %v242, 1e-05
  %v249 = vsub.f32 1.0, %v237
  %v250 = vsub.f32 1.0, %v238
  %v251 = vsub.f32 1.0, %v239
  %v252 = vsub.f32 1.0, %v240
  %v253 = vsub.f32 1.0, %v241
  %v254 = vsub.f32 1.0, %v242
  %v255 = vmax.f32 %v249, 1e-05
  %v256 = vmax.f32 %v250, 1e-05
  %v257 = vmax.f32 %v251, 1e-05
  %v258 = vmax.f32 %v252, 1e-05
  %v259 = vmax.f32 %v253, 1e-05
  %v260 = vmax.f32 %v254, 1e-05
  %v261 = vrcp.pop %v255
  %v262 = vmul.f32 %v255, %v261
  %v263 = vsub.f32 1.0, %v262
  %v264 = vmul.f32 %v261, %v263
  %v265 = vadd.f32 %v261, %v264
  %vm266 = vweird.f32 %v255
  %vm267 = vweird.f32 %v261
  %vm268 = vmor %vm266, %vm267
  %v269 = vsel %vm268, %v261, %v265
  %v270 = vand.u32 2147483647, %v255
  %vm271 = vcmp.eq.f32.partialorder %v270, 8.507059e+37
  %v272 = vand.u32 %v255, 2147483648
  %v273 = vor.u32 1.1754944e-38, %v272
  %v274 = vsel %vm271, %v273, %v269
  %v275 = vmul.f32 %v243, %v274
  %v276 = vrcp.pop %v256
  %v277 = vmul.f32 %v256, %v276
  %v278 = vsub.f32 1.0, %v277
  %v279 = vmul.f32 %v276, %v278
  %v280 = vadd.f32 %v276, %v279
  %vm281 = vweird.f32 %v256
  %vm282 = vweird.f32 %v276
  %vm283 = vmor %vm281, %vm282
  %v284 = vsel %vm283, %v276, %v280
  %v285 = vand.u32 2147483647, %v256
  %vm286 = vcmp.eq.f32.partialorder %v285, 8.507059e+37
  %v287 = vand.u32 %v256, 2147483648
  %v288 = vor.u32 1.1754944e-38, %v287
  %v289 = vsel %vm286, %v288, %v284
  %v290 = vmul.f32 %v244, %v289
  %v291 = vrcp.pop %v257
  %v292 = vmul.f32 %v257, %v291
  %v293 = vsub.f32 1.0, %v292
  %v294 = vmul.f32 %v291, %v293
  %v295 = vadd.f32 %v291, %v294
  %vm296 = vweird.f32 %v257
  %vm297 = vweird.f32 %v291
  %vm298 = vmor %vm296, %vm297
  %v299 = vsel %vm298, %v291, %v295
  %v300 = vand.u32 2147483647, %v257
  %vm301 = vcmp.eq.f32.partialorder %v300, 8.507059e+37
  %v302 = vand.u32 %v257, 2147483648
  %v303 = vor.u32 1.1754944e-38, %v302
  %v304 = vsel %vm301, %v303, %v299
  %v305 = vmul.f32 %v245, %v304
  %v306 = vrcp.pop %v258
  %v307 = vmul.f32 %v258, %v306
  %v308 = vsub.f32 1.0, %v307
  %v309 = vmul.f32 %v306, %v308
  %v310 = vadd.f32 %v306, %v309
  %vm311 = vweird.f32 %v258
  %vm312 = vweird.f32 %v306
  %vm313 = vmor %vm311, %vm312
  %v314 = vsel %vm313, %v306, %v310
  %v315 = vand.u32 2147483647, %v258
  %vm316 = vcmp.eq.f32.partialorder %v315, 8.507059e+37
  %v317 = vand.u32 %v258, 2147483648
  %v318 = vor.u32 1.1754944e-38, %v317
  %v319 = vsel %vm316, %v318, %v314
  %v320 = vmul.f32 %v246, %v319
  %v321 = vrcp.pop %v259
  %v322 = vmul.f32 %v259, %v321
  %v323 = vsub.f32 1.0, %v322
  %v324 = vmul.f32 %v321, %v323
  %v325 = vadd.f32 %v321, %v324
  %vm326 = vweird.f32 %v259
  %vm327 = vweird.f32 %v321
  %vm328 = vmor %vm326, %vm327
  %v329 = vsel %vm328, %v321, %v325
  %v330 = vand.u32 2147483647, %v259
  %vm331 = vcmp.eq.f32.partialorder %v330, 8.507059e+37
  %v332 = vand.u32 %v259, 2147483648
  %v333 = vor.u32 1.1754944e-38, %v332
  %v334 = vsel %vm331, %v333, %v329
  %v335 = vmul.f32 %v247, %v334
  %v336 = vrcp.pop %v260
  %v337 = vmul.f32 %v260, %v336
  %v338 = vsub.f32 1.0, %v337
  %v339 = vmul.f32 %v336, %v338
  %v340 = vadd.f32 %v336, %v339
  %vm341 = vweird.f32 %v260
  %vm342 = vweird.f32 %v336
  %vm343 = vmor %vm341, %vm342
  %v344 = vsel %vm343, %v336, %v340
  %v345 = vand.u32 2147483647, %v260
  %vm346 = vcmp.eq.f32.partialorder %v345, 8.507059e+37
  %v347 = vand.u32 %v260, 2147483648
  %v348 = vor.u32 1.1754944e-38, %v347
  %v349 = vsel %vm346, %v348, %v344
  %v350 = vmul.f32 %v248, %v349
  %v351 = vlog2.pop %v275
  %v352 = vmul.f32 %v351, 0.6931472
  %v353 = vlog2.pop %v290
  %v354 = vmul.f32 %v353, 0.6931472
  %v355 = vlog2.pop %v305
  %v356 = vmul.f32 %v355, 0.6931472
  %v357 = vlog2.pop %v320
  %v358 = vmul.f32 %v357, 0.6931472
  %v359 = vlog2.pop %v335
  %v360 = vmul.f32 %v359, 0.6931472
  %v361 = vlog2.pop %v350
  %v362 = vmul.f32 %v361, 0.6931472
  %v363 = vadd.f32 %v208, %v352
  %v364 = vadd.f32 %v211, %v354
  %v365 = vadd.f32 %v214, %v356
  %v366 = vadd.f32 %v217, %v358
  %v367 = vadd.f32 %v220, %v360
  %v368 = vadd.f32 %v223, %v362
  %v369 = vxor.u32 %v363, 2147483648
  %v370 = vxor.u32 %v364, 2147483648
  %v371 = vxor.u32 %v365, 2147483648
  %v372 = vxor.u32 %v366, 2147483648
  %v373 = vxor.u32 %v367, 2147483648
  %v374 = vxor.u32 %v368, 2147483648
  %v375 = vmul.f32 %v369, 1.442695
  %v376 = vpow.pop %v375
  %v377 = vmul.f32 %v370, 1.442695
  %v378 = vpow.pop %v377
  %v379 = vmul.f32 %v371, 1.442695
  %v380 = vpow.pop %v379
  %v381 = vmul.f32 %v372, 1.442695
  %v382 = vpow.pop %v381
  %v383 = vmul.f32 %v373, 1.442695
  %v384 = vpow.pop %v383
  %v385 = vmul.f32 %v374, 1.442695
  %v386 = vpow.pop %v385
  %v387 = vadd.f32 %v376, 1.0
  %v388 = vadd.f32 %v378, 1.0
  %v389 = vadd.f32 %v380, 1.0
  %v390 = vadd.f32 %v382, 1.0
  %v391 = vadd.f32 %v384, 1.0
  %v392 = vadd.f32 %v386, 1.0
  %v393 = vrcp.pop %v387
  %v394 = vmul.f32 %v387, %v393
  %v395 = vsub.f32 1.0, %v394
  %v396 = vmul.f32 %v393, %v395
  %v397 = vadd.f32 %v393, %v396
  %vm398 = vweird.f32 %v387
  %vm399 = vweird.f32 %v393
  %vm400 = vmor %vm398, %vm399
  %v401 = vsel %vm400, %v393, %v397
  %v402 = vand.u32 2147483647, %v387
  %vm403 = vcmp.eq.f32.partialorder %v402, 8.507059e+37
  %v404 = vand.u32 %v387, 2147483648
  %v405 = vor.u32 1.1754944e-38, %v404
  %v406 = vsel %vm403, %v405, %v401
  %v407 = vmul.f32 1.0, %v406
  %v408 = vrcp.pop %v388
  %v409 = vmul.f32 %v388, %v408
  %v410 = vsub.f32 1.0, %v409
  %v411 = vmul.f32 %v408, %v410
  %v412 = vadd.f32 %v408, %v411
  %vm413 = vweird.f32 %v388
  %vm414 = vweird.f32 %v408
  %vm415 = vmor %vm413, %vm414
  %v416 = vsel %vm415, %v408, %v412
  %v417 = vand.u32 2147483647, %v388
  %vm418 = vcmp.eq.f32.partialorder %v417, 8.507059e+37
  %v419 = vand.u32 %v388, 2147483648
  %v420 = vor.u32 1.1754944e-38, %v419
  %v421 = vsel %vm418, %v420, %v416
  %v422 = vmul.f32 1.0, %v421
  %v423 = vrcp.pop %v389
  %v424 = vmul.f32 %v389, %v423
  %v425 = vsub.f32 1.0, %v424
  %v426 = vmul.f32 %v423, %v425
  %v427 = vadd.f32 %v423, %v426
  %vm428 = vweird.f32 %v389
  %vm429 = vweird.f32 %v423
  %vm430 = vmor %vm428, %vm429
  %v431 = vsel %vm430, %v423, %v427
  %v432 = vand.u32 2147483647, %v389
  %vm433 = vcmp.eq.f32.partialorder %v432, 8.507059e+37
  %v434 = vand.u32 %v389, 2147483648
  %v435 = vor.u32 1.1754944e-38, %v434
  %v436 = vsel %vm433, %v435, %v431
  %v437 = vmul.f32 1.0, %v436
  %v438 = vrcp.pop %v390
  %v439 = vmul.f32 %v390, %v438
  %v440 = vsub.f32 1.0, %v439
  %v441 = vmul.f32 %v438, %v440
  %v442 = vadd.f32 %v438, %v441
  %vm443 = vweird.f32 %v390
  %vm444 = vweird.f32 %v438
  %vm445 = vmor %vm443, %vm444
  %v446 = vsel %vm445, %v438, %v442
  %v447 = vand.u32 2147483647, %v390
  %vm448 = vcmp.eq.f32.partialorder %v447, 8.507059e+37
  %v449 = vand.u32 %v390, 2147483648
  %v450 = vor.u32 1.1754944e-38, %v449
  %v451 = vsel %vm448, %v450, %v446
  %v452 = vmul.f32 1.0, %v451
  %v453 = vrcp.pop %v391
  %v454 = vmul.f32 %v391, %v453
  %v455 = vsub.f32 1.0, %v454
  %v456 = vmul.f32 %v453, %v455
  %v457 = vadd.f32 %v453, %v456
  %vm458 = vweird.f32 %v391
  %vm459 = vweird.f32 %v453
  %vm460 = vmor %vm458, %vm459
  %v461 = vsel %vm460, %v453, %v457
  %v462 = vand.u32 2147483647, %v391
  %vm463 = vcmp.eq.f32.partialorder %v462, 8.507059e+37
  %v464 = vand.u32 %v391, 2147483648
  %v465 = vor.u32 1.1754944e-38, %v464
  %v466 = vsel %vm463, %v465, %v461
  %v467 = vmul.f32 1.0, %v466
  %v468 = vrcp.pop %v392
  %v469 = vmul.f32 %v392, %v468
  %v470 = vsub.f32 1.0, %v469
  %v471 = vmul.f32 %v468, %v470
  %v472 = vadd.f32 %v468, %v471
  %vm473 = vweird.f32 %v392
  %vm474 = vweird.f32 %v468
  %vm475 = vmor %vm473, %vm474
  %v476 = vsel %vm475, %v468, %v472
  %v477 = vand.u32 2147483647, %v392
  %vm478 = vcmp.eq.f32.partialorder %v477, 8.507059e+37
  %v479 = vand.u32 %v392, 2147483648
  %v480 = vor.u32 1.1754944e-38, %v479
  %v481 = vsel %vm478, %v480, %v476
  %v482 = vmul.f32 1.0, %v481
  %v483 = vlaneseq
  %v484 = vand.u32 %v483, 127
  %vm485 = vcmp.ge.s32.totalorder %v484, 32
  %vm486 = vcmp.lt.s32.totalorder %v484, 48
  %vm487 = vmand %vm485, %vm486
  %v488 = vsel %vm487, %v80, %v407
  %v489 = vsel %vm487, %v83, %v422
  %v490 = vsel %vm487, %v86, %v437
  %v491 = vsel %vm487, %v89, %v452
  %v492 = vsel %vm487, %v92, %v467
  %v493 = vsel %vm487, %v95, %v482
  %494 = vst [vmem:[%s8] sm:$0xff] %v488
  %495 = vst [vmem:[%s8 + $0x8] sm:$0xff] %v489
  %496 = vst [vmem:[%s8 + $0x10] sm:$0xff] %v490
  %497 = vst [vmem:[%s8 + $0x18] sm:$0xff] %v491
  %498 = vst [vmem:[%s8 + $0x20] sm:$0xff] %v492
  %499 = vst [vmem:[%s8 + $0x28] sm:$0xff] %v493
  // Predicated region
  $region34: #{deformable_pose_transformer_forward.5} parent=0 // pred_check
    _
  $region35: #{deformable_pose_transformer_forward.5} parent=0 // pred_check_branch
    %501 = sbr.rel (0) target = $region37
  $region36: #{deformable_pose_transformer_forward.5} parent=0 // pred_region
    _
  $region37: #{deformable_pose_transformer_forward.5} parent=0 // pred_fallthru
    _
  // Predicated region
  $region38: #{deformable_pose_transformer_forward.5} parent=0 // pred_check
    _
  $region39: #{deformable_pose_transformer_forward.5} parent=0 // pred_check_branch
    %503 = sbr.rel (0) target = $region41
  $region40: #{deformable_pose_transformer_forward.5} parent=0 // pred_region
    _
  $region41: #{deformable_pose_transformer_forward.5} parent=0 // pred_fallthru
    _

</llo_original>
